<compile_context>
chip_gen: v7x
topology: tpu7x:2x2x1
jax: 0.10.0
libtpu: 0.0.40
codegen_flags: <defaults>
</compile_context>

<pallas_src>
import functools

import jax
import jax.numpy as jnp
from jax.experimental import pallas as pl
from jax.experimental.pallas import tpu as pltpu
from jax.scipy.special import digamma as _jsp_digamma, gammaln as _jsp_gammaln

_LANE = 128
_TARGET_ROWS = 512           # 512 rows x 128 lanes = 65536 voxels per grid step
_MAX_IN_BYTES = 12 << 20     # 2 inputs x 2 pipeline buffers budget (safe on v5e/v6e/v7x)


# ----------------------------- in-kernel special functions -----------------------------

def _digamma(x):
    """psi(x) for x > 0: 8-term recurrence folded into 4 pairwise reciprocals
    (1/z + 1/(z+1) = (2z+1)/(z(z+1))) + asymptotic series; ~1e-6 abs in f32."""
    z = x
    shift = jnp.zeros_like(x)
    for _ in range(4):
        shift = shift + (2.0 * z + 1.0) / (z * (z + 1.0))
        z = z + 2.0
    inv = 1.0 / z
    inv2 = inv * inv
    series = (jnp.log(z) - 0.5 * inv
              - inv2 * (1.0 / 12.0 - inv2 * (1.0 / 120.0 - inv2 * (1.0 / 252.0))))
    return series - shift


def _lgamma(x):
    """lgamma(x) for x > 0: 6-step recurrence written as ONE log of a product
    (5 VPU muls + 1 EUP log instead of 6 serial logs) + Stirling series.
    Valid while x*(x+1)*...*(x+5) stays in f32 range (x < ~1e6)."""
    prod = x
    z = x
    for _ in range(5):
        z = z + 1.0
        prod = prod * z
    z = z + 1.0                                    # z = x + 6
    inv = 1.0 / z
    inv2 = inv * inv
    stirling = ((z - 0.5) * jnp.log(z) - z + 0.9189385332046727
                + inv * (1.0 / 12.0 - inv2 * (1.0 / 360.0 - inv2 * (1.0 / 1260.0))))
    return stirling - jnp.log(prod)


# ------------------------------------- kernel ------------------------------------------

def _voxel_loss_kernel(alpha_ref, y_ref, out_ref, acc_ref, *,
                       loss_fn, gamma, c, hw, rows_tile, n_inner, needs_mask):
    o = pl.program_id(1)
    j = pl.program_id(2)

    @pl.when(j == 0)
    def _():
        acc_ref[...] = jnp.zeros_like(acc_ref)

    # Per-class dense (rows_tile, 128) planes: full (sublane, lane) vreg occupancy.
    a = [alpha_ref[k].astype(jnp.float32) for k in range(c)]
    t = [y_ref[k].astype(jnp.float32) for k in range(c)]

    s = a[0]
    for k in range(1, c):                          # S = sum_c alpha: (c-1) dense VPU adds
        s = s + a[k]

    if loss_fn == "NLL":
        log_s = jnp.log(s)
        tot = None
        for k in range(c):
            term = t[k] * (log_s - jnp.log(a[k]))
            tot = term if tot is None else tot + term
    elif loss_fn == "CE":
        dg_s = _digamma(s)
        tot = None
        for k in range(c):
            term = t[k] * (dg_s - _digamma(a[k]))
            tot = term if tot is None else tot + term
    elif loss_fn == "Focal":
        g = float(gamma)
        if g.is_integer() and g >= 0.0:
            # Exact Pochhammer rewrite for integer gamma (the common case):
            #   Gamma(x+g)/Gamma(x) = x (x+1) ... (x+g-1)
            #   w = poch(S - alpha, g) / poch(S, g)   -> no lgamma, no exp.
            gi = int(g)
            dg_sg = _digamma(s + g) if gi else _digamma(s)
            if gi:
                den = s
                for r in range(1, gi):
                    den = den * (s + float(r))
                inv_den = 1.0 / den                # one divide per tile, class-independent
            tot = None
            for k in range(c):
                term = dg_sg - _digamma(a[k])
                if gi:
                    sa = s - a[k]
                    num = sa
                    for r in range(1, gi):
                        num = num * (sa + float(r))
                    term = term * (num * inv_den)
                term = t[k] * term
                tot = term if tot is None else tot + term
        else:
            # Fractional gamma fallback: lgamma/exp path, class-independent pieces hoisted.
            gf = jnp.float32(g)
            dg_sg = _digamma(s + gf)
            lg_s = _lgamma(s)
            lg_sg = _lgamma(s + gf)
            tot = None
            for k in range(c):
                sa = s - a[k]
                w = jnp.exp(lg_s + _lgamma(sa + gf) - _lgamma(sa) - lg_sg)
                term = t[k] * ((dg_sg - _digamma(a[k])) * w)
                tot = term if tot is None else tot + term
    elif loss_fn == "SOS":
        inv_s = 1.0 / s                            # 2 divides per tile instead of 2*c
        fac = inv_s * inv_s * (1.0 / (s + 1.0))
        tot = None
        for k in range(c):
            e = t[k] - a[k] * inv_s
            term = e * e + a[k] * (s - a[k]) * fac
            tot = term if tot is None else tot + term
    else:
        raise ValueError(f"unknown loss_fn: {loss_fn}")

    if needs_mask:
        # Only SOS needs this: padded voxels (alpha=1, y=0) have a nonzero variance term;
        # for NLL/CE/Focal the padded y=0 already zeroes the loss.
        row0 = (o * n_inner + j) * rows_tile
        r_idx = jax.lax.broadcasted_iota(jnp.int32, tot.shape, 0)
        l_idx = jax.lax.broadcasted_iota(jnp.int32, tot.shape, 1)
        tot = jnp.where((row0 + r_idx) * _LANE + l_idx < hw, tot, 0.0)

    # Lane-wise accumulation only (dense VPU adds); cross-lane reduce deferred to epilogue.
    acc_ref[...] += tot

    @pl.when(j == pl.num_programs(2) - 1)
    def _():
        total = jnp.sum(acc_ref[...])              # one XLU reduce per (image, outer slice)
        out_ref[...] = jnp.zeros_like(out_ref) + total


# ------------------------------------- wrapper -----------------------------------------

def _round_up(x, m):
    return ((x + m - 1) // m) * m


def _choose_tiling(rows, max_rows, target_rows):
    """Return (rows_tile, rows_pad): rows_tile divides rows_pad and satisfies the (8,128)
    rule (multiple of 8 or full extent); prefers configurations that need no pad copy."""
    if rows <= max_rows:
        return rows, rows                          # full-extent block: exempt from 8-divisibility
    best = 0
    d = 8
    limit = min(rows, max_rows)
    while d <= limit:
        if rows % d == 0:
            best = d
        d += 8
    if best >= 64:                                 # >= 8K voxels per step: fine, no pad copy
        return best, rows
    rows_tile = min(_round_up(target_rows, 8), max_rows - (max_rows % 8))
    rows_tile = max(rows_tile, 8)
    return rows_tile, _round_up(rows, rows_tile)


def voxel_loss(alpha, y, *, loss_fn="CE", gamma=0.0):
    """alpha, y: [N, C, H, W] (f32 or bf16); returns scalar loss matching VoxelLoss.forward."""
    if loss_fn not in ("NLL", "CE", "Focal", "SOS"):
        raise ValueError(f"unknown loss_fn: {loss_fn}")
    n, c, h, w = alpha.shape
    hw = h * w
    m = n * hw

    itemsize = max(jnp.dtype(alpha.dtype).itemsize, jnp.dtype(y.dtype).itemsize)
    # 2 inputs x 2 pipeline buffers x c planes x rows x 128 lanes x itemsize <= budget.
    max_rows = max(8, _MAX_IN_BYTES // (2 * 2 * c * _LANE * itemsize))
    rows = _round_up(hw, _LANE) // _LANE
    rows_tile, rows_pad = _choose_tiling(rows, max_rows, _TARGET_ROWS)
    hw_pad = rows_pad * _LANE

    a3 = alpha.reshape(n, c, hw)                   # NCHW kept; view-only reshapes
    y3 = y.reshape(n, c, hw)
    if hw_pad != hw:
        # TODO(synk): this jnp.pad copies both tensors in HBM; only hit when H*W is not
        # 128-aligned (or has no usable row divisor).
        pad = hw_pad - hw
        a3 = jnp.pad(a3, ((0, 0), (0, 0), (0, pad)), constant_values=1.0)
        y3 = jnp.pad(y3, ((0, 0), (0, 0), (0, pad)), constant_values=0.0)
    a4 = a3.reshape(n, c, rows_pad, _LANE)         # spatial -> (sublane rows, 128 lanes)
    y4 = y3.reshape(n, c, rows_pad, _LANE)

    n_blocks = rows_pad // rows_tile
    # Megacore (v7x has 2 TCs): ensure >= 2 'parallel' work units exist when N == 1.
    n_outer = 1
    if n < 2 and n_blocks >= 2:
        for d in range(2, min(8, n_blocks) + 1):
            if n_blocks % d == 0:
                n_outer = d
                break
    n_inner = n_blocks // n_outer

    needs_mask = (hw_pad != hw) and (loss_fn == "SOS")

    kernel = functools.partial(
        _voxel_loss_kernel, loss_fn=loss_fn, gamma=float(gamma), c=c, hw=hw,
        rows_tile=rows_tile, n_inner=n_inner, needs_mask=needs_mask)

    trans_per_voxel = {"NLL": c + 1, "CE": 6 * (c + 1),
                       "Focal": 7 * (c + 1), "SOS": 2}[loss_fn]
    cost = pl.CostEstimate(
        flops=int(20 * n * c * hw_pad),
        transcendentals=int(trans_per_voxel * n * hw_pad),
        bytes_accessed=int(a4.size * a4.dtype.itemsize + y4.size * y4.dtype.itemsize
                           + n * n_outer * 8 * _LANE * 4))

    partials = pl.pallas_call(
        kernel,
        out_shape=jax.ShapeDtypeStruct((n, n_outer, 8, _LANE), jnp.float32),
        grid_spec=pltpu.PrefetchScalarGridSpec(
            num_scalar_prefetch=0,
            grid=(n, n_outer, n_inner),
            in_specs=[
                pl.BlockSpec((None, c, rows_tile, _LANE),
                             lambda i, o, j: (i, 0, o * n_inner + j, 0)),
                pl.BlockSpec((None, c, rows_tile, _LANE),
                             lambda i, o, j: (i, 0, o * n_inner + j, 0)),
            ],
            out_specs=pl.BlockSpec((None, None, 8, _LANE),
                                   lambda i, o, j: (i, o, 0, 0)),
            scratch_shapes=[
                pltpu.VMEM((rows_tile, _LANE), jnp.float32),   # class-summed loss accumulator
            ],
        ),
        compiler_params=pltpu.CompilerParams(
            dimension_semantics=("parallel", "parallel", "arbitrary"),
            vmem_limit_bytes=32 * 1024 * 1024),
        cost_estimate=cost,
    )(a4, y4)

    # Tiny finish in JAX: sum the per-(image, outer slice) partials, divide by voxel count.
    return jnp.sum(partials[:, :, 0, 0]) / jnp.float32(m)


class VoxelLoss:
    """Drop-in mirror of the PyTorch module's constructor/forward."""

    def __init__(self, loss_fn, gamma=0):
        self.loss_fn = loss_fn
        self.gamma = gamma

    def __call__(self, alpha, y):
        return voxel_loss(alpha, y, loss_fn=self.loss_fn, gamma=self.gamma)


# ------------------------------------ reference ----------------------------------------

def _voxel_loss_ref(alpha, y, loss_fn, gamma=0.0):
    a = alpha.astype(jnp.float32)
    t = y.astype(jnp.float32)
    s = jnp.sum(a, axis=1, keepdims=True)
    if loss_fn == "NLL":
        loss = t * (jnp.log(s) - jnp.log(a))
    elif loss_fn == "CE":
        loss = t * (_jsp_digamma(s) - _jsp_digamma(a))
    elif loss_fn == "Focal":
        g = jnp.float32(gamma)
        loss = t * ((_jsp_digamma(s + g) - _jsp_digamma(a))
                    * jnp.exp(_jsp_gammaln(s) + _jsp_gammaln(s - a + g)
                              - _jsp_gammaln(s - a) - _jsp_gammaln(s + g)))
    elif loss_fn == "SOS":
        err = (t - a / s) ** 2
        var = a * (s - a) / (s * s * (s + 1.0))
        loss = err + var
    else:
        raise ValueError(loss_fn)
    return jnp.mean(jnp.sum(loss, axis=1))


# -------------------------------------- main -------------------------------------------

if __name__ == "__main__":
    key = jax.random.PRNGKey(0)
    k1, k2, k3, k4 = jax.random.split(key, 4)

    N, C, H, W = 2, 4, 16, 16
    alpha = jax.random.uniform(k1, (N, C, H, W), jnp.float32, minval=1.0, maxval=4.0)
    labels = jax.random.randint(k2, (N, H, W), 0, C)
    y = jax.nn.one_hot(labels, C, axis=1, dtype=jnp.float32)   # dense NCHW targets

    cases = (("NLL", 0.0), ("CE", 0.0), ("Focal", 2.0), ("Focal", 1.5), ("SOS", 0.0))
    for loss_fn, gamma in cases:
        out = jax.block_until_ready(VoxelLoss(loss_fn, gamma)(alpha, y))
        ref = _voxel_loss_ref(alpha, y, loss_fn, gamma)
        assert jnp.allclose(out, ref, atol=1e-4, rtol=1e-4), (loss_fn, gamma, out, ref)

    # Padded path (H*W not 128-aligned): CE (pad zeroed by y=0) and SOS (in-kernel mask).
    H2 = W2 = 10
    alpha2 = jax.random.uniform(k3, (N, C, H2, W2), jnp.float32, minval=1.0, maxval=4.0)
    y2 = jax.nn.one_hot(jax.random.randint(k4, (N, H2, W2), 0, C), C, axis=1,
                        dtype=jnp.float32)
    for loss_fn in ("CE", "SOS"):
        out2 = jax.block_until_ready(voxel_loss(alpha2, y2, loss_fn=loss_fn))
        ref2 = _voxel_loss_ref(alpha2, y2, loss_fn)
        assert jnp.allclose(out2, ref2, atol=1e-4, rtol=1e-4), (loss_fn, out2, ref2)

    print("KERNEL_OK")
</pallas_src>

<mosaic_0001>
module attributes {stable_mosaic.version = 11 : i64} {
  func.func @_voxel_loss_kernel(%arg0: i32, %arg1: i32, %arg2: i32, %arg3: memref<1x4x2x128xf32, #tpu.memory_space<vmem>>, %arg4: memref<1x4x2x128xf32, #tpu.memory_space<vmem>>, %arg5: memref<1x1x8x128xf32, #tpu.memory_space<vmem>>, %arg6: memref<2x128xf32, #tpu.memory_space<vmem>>) attributes {dimension_semantics = [#tpu.dimension_semantics<parallel>, #tpu.dimension_semantics<parallel>, #tpu.dimension_semantics<arbitrary>], iteration_bounds = array<i64: 2, 1, 1>, scalar_prefetch = 0 : i64, scratch_operands = 1 : i64, tpu.core_type = #tpu.core_type<tc>, window_params = [{transform_indices = @transform_0, window_bounds = array<i64: 1, 4, 2, 128>}, {transform_indices = @transform_1, window_bounds = array<i64: 1, 4, 2, 128>}, {transform_indices = @transform_2, window_bounds = array<i64: 1, 1, 8, 128>}]} {
    %c0_i32 = arith.constant 0 : i32
    %0 = arith.cmpi eq, %arg2, %c0_i32 : i32
    %1 = arith.extui %0 : i1 to i32
    %c0_i32_0 = arith.constant 0 : i32
    %2 = arith.cmpi ne, %1, %c0_i32_0 : i32
    scf.if %2 {
      %cst = arith.constant 0.000000e+00 : f32
      %44 = vector.broadcast %cst : f32 to vector<2x128xf32>
      %c0_35 = arith.constant 0 : index
      %c0_36 = arith.constant 0 : index
      %45 = vector.load %arg6[%c0_35, %c0_36] : memref<2x128xf32, #tpu.memory_space<vmem>>, vector<2x128xf32>
      tpu.vector_store %arg6[%c0_35, %c0_36], %44 {strides = array<i32>} : memref<2x128xf32, #tpu.memory_space<vmem>>, vector<2x128xf32>,
    } else {
    }
    %c0 = arith.constant 0 : index
    %c0_1 = arith.constant 0 : index
    %c0_2 = arith.constant 0 : index
    %c0_3 = arith.constant 0 : index
    %3 = vector.load %arg3[%c0, %c0_1, %c0_2, %c0_3] : memref<1x4x2x128xf32, #tpu.memory_space<vmem>>, vector<1x1x2x128xf32>
    %4 = vector.shape_cast %3 : vector<1x1x2x128xf32> to vector<2x128xf32>
    %c0_4 = arith.constant 0 : index
    %c1 = arith.constant 1 : index
    %c0_5 = arith.constant 0 : index
    %c0_6 = arith.constant 0 : index
    %5 = vector.load %arg3[%c0_4, %c1, %c0_5, %c0_6] : memref<1x4x2x128xf32, #tpu.memory_space<vmem>>, vector<1x1x2x128xf32>
    %6 = vector.shape_cast %5 : vector<1x1x2x128xf32> to vector<2x128xf32>
    %c0_7 = arith.constant 0 : index
    %c2 = arith.constant 2 : index
    %c0_8 = arith.constant 0 : index
    %c0_9 = arith.constant 0 : index
    %7 = vector.load %arg3[%c0_7, %c2, %c0_8, %c0_9] : memref<1x4x2x128xf32, #tpu.memory_space<vmem>>, vector<1x1x2x128xf32>
    %8 = vector.shape_cast %7 : vector<1x1x2x128xf32> to vector<2x128xf32>
    %c0_10 = arith.constant 0 : index
    %c3 = arith.constant 3 : index
    %c0_11 = arith.constant 0 : index
    %c0_12 = arith.constant 0 : index
    %9 = vector.load %arg3[%c0_10, %c3, %c0_11, %c0_12] : memref<1x4x2x128xf32, #tpu.memory_space<vmem>>, vector<1x1x2x128xf32>
    %10 = vector.shape_cast %9 : vector<1x1x2x128xf32> to vector<2x128xf32>
    %c0_13 = arith.constant 0 : index
    %c0_14 = arith.constant 0 : index
    %c0_15 = arith.constant 0 : index
    %c0_16 = arith.constant 0 : index
    %11 = vector.load %arg4[%c0_13, %c0_14, %c0_15, %c0_16] : memref<1x4x2x128xf32, #tpu.memory_space<vmem>>, vector<1x1x2x128xf32>
    %12 = vector.shape_cast %11 : vector<1x1x2x128xf32> to vector<2x128xf32>
    %c0_17 = arith.constant 0 : index
    %c1_18 = arith.constant 1 : index
    %c0_19 = arith.constant 0 : index
    %c0_20 = arith.constant 0 : index
    %13 = vector.load %arg4[%c0_17, %c1_18, %c0_19, %c0_20] : memref<1x4x2x128xf32, #tpu.memory_space<vmem>>, vector<1x1x2x128xf32>
    %14 = vector.shape_cast %13 : vector<1x1x2x128xf32> to vector<2x128xf32>
    %c0_21 = arith.constant 0 : index
    %c2_22 = arith.constant 2 : index
    %c0_23 = arith.constant 0 : index
    %c0_24 = arith.constant 0 : index
    %15 = vector.load %arg4[%c0_21, %c2_22, %c0_23, %c0_24] : memref<1x4x2x128xf32, #tpu.memory_space<vmem>>, vector<1x1x2x128xf32>
    %16 = vector.shape_cast %15 : vector<1x1x2x128xf32> to vector<2x128xf32>
    %c0_25 = arith.constant 0 : index
    %c3_26 = arith.constant 3 : index
    %c0_27 = arith.constant 0 : index
    %c0_28 = arith.constant 0 : index
    %17 = vector.load %arg4[%c0_25, %c3_26, %c0_27, %c0_28] : memref<1x4x2x128xf32, #tpu.memory_space<vmem>>, vector<1x1x2x128xf32>
    %18 = vector.shape_cast %17 : vector<1x1x2x128xf32> to vector<2x128xf32>
    %19 = arith.addf %4, %6 : vector<2x128xf32>
    %20 = arith.addf %19, %8 : vector<2x128xf32>
    %21 = arith.addf %20, %10 : vector<2x128xf32>
    %22 = math.log %21 : vector<2x128xf32>
    %23 = math.log %4 : vector<2x128xf32>
    %24 = arith.subf %22, %23 : vector<2x128xf32>
    %25 = arith.mulf %12, %24 : vector<2x128xf32>
    %26 = math.log %6 : vector<2x128xf32>
    %27 = arith.subf %22, %26 : vector<2x128xf32>
    %28 = arith.mulf %14, %27 : vector<2x128xf32>
    %29 = arith.addf %25, %28 : vector<2x128xf32>
    %30 = math.log %8 : vector<2x128xf32>
    %31 = arith.subf %22, %30 : vector<2x128xf32>
    %32 = arith.mulf %16, %31 : vector<2x128xf32>
    %33 = arith.addf %29, %32 : vector<2x128xf32>
    %34 = math.log %10 : vector<2x128xf32>
    %35 = arith.subf %22, %34 : vector<2x128xf32>
    %36 = arith.mulf %18, %35 : vector<2x128xf32>
    %37 = arith.addf %33, %36 : vector<2x128xf32>
    %c0_29 = arith.constant 0 : index
    %c0_30 = arith.constant 0 : index
    %38 = vector.load %arg6[%c0_29, %c0_30] : memref<2x128xf32, #tpu.memory_space<vmem>>, vector<2x128xf32>
    %39 = arith.addf %38, %37 : vector<2x128xf32>
    %c0_31 = arith.constant 0 : index
    %c0_32 = arith.constant 0 : index
    %40 = vector.load %arg6[%c0_31, %c0_32] : memref<2x128xf32, #tpu.memory_space<vmem>>, vector<2x128xf32>
    tpu.vector_store %arg6[%c0_31, %c0_32], %39 {strides = array<i32>} : memref<2x128xf32, #tpu.memory_space<vmem>>, vector<2x128xf32>,
    %c0_i32_33 = arith.constant 0 : i32
    %41 = arith.cmpi eq, %arg2, %c0_i32_33 : i32
    %42 = arith.extui %41 : i1 to i32
    %c0_i32_34 = arith.constant 0 : i32
    %43 = arith.cmpi ne, %42, %c0_i32_34 : i32
    scf.if %43 {
      %c0_35 = arith.constant 0 : index
      %c0_36 = arith.constant 0 : index
      %44 = vector.load %arg6[%c0_35, %c0_36] : memref<2x128xf32, #tpu.memory_space<vmem>>, vector<2x128xf32>
      %45 = vector.shape_cast %44 : vector<2x128xf32> to vector<1x2x128xf32>
      %cst = arith.constant dense<0.000000e+00> : vector<1xf32>
      %46 = vector.multi_reduction <add>, %45, %cst [1, 2] : vector<1x2x128xf32> to vector<1xf32>
      %47 = vector.shape_cast %46 : vector<1xf32> to vector<1x1x1xf32>
      %48 = vector.extract %47[0, 0, 0] : f32 from vector<1x1x1xf32>
      %cst_37 = arith.constant 0.000000e+00 : f32
      %49 = vector.broadcast %cst_37 : f32 to vector<8x128xf32>
      %50 = vector.broadcast %48 : f32 to vector<8x128xf32>
      %51 = arith.addf %49, %50 : vector<8x128xf32>
      %c0_38 = arith.constant 0 : index
      %c0_39 = arith.constant 0 : index
      %c0_40 = arith.constant 0 : index
      %c0_41 = arith.constant 0 : index
      %52 = vector.load %arg5[%c0_38, %c0_39, %c0_40, %c0_41] : memref<1x1x8x128xf32, #tpu.memory_space<vmem>>, vector<1x1x8x128xf32>
      %53 = vector.shape_cast %52 : vector<1x1x8x128xf32> to vector<8x128xf32>
      %54 = vector.shape_cast %51 : vector<8x128xf32> to vector<1x1x8x128xf32>
      tpu.vector_store %arg5[%c0_38, %c0_39, %c0_40, %c0_41], %54 {strides = array<i32>} : memref<1x1x8x128xf32, #tpu.memory_space<vmem>>, vector<1x1x8x128xf32>,
    } else {
    }
    return
  }
  func.func @transform_0(%arg0: i32, %arg1: i32, %arg2: i32) -> (i32, i32, i32, i32) {
    %c1_i32 = arith.constant 1 : i32
    %0 = arith.muli %arg1, %c1_i32 : i32
    %1 = arith.addi %0, %arg2 : i32
    %c0_i32 = arith.constant 0 : i32
    %c0_i32_0 = arith.constant 0 : i32
    %c0_i32_1 = arith.constant 0 : i32
    return %arg0, %c0_i32, %1, %c0_i32_0 : i32, i32, i32, i32
  }
  func.func @transform_1(%arg0: i32, %arg1: i32, %arg2: i32) -> (i32, i32, i32, i32) {
    %c1_i32 = arith.constant 1 : i32
    %0 = arith.muli %arg1, %c1_i32 : i32
    %1 = arith.addi %0, %arg2 : i32
    %c0_i32 = arith.constant 0 : i32
    %c0_i32_0 = arith.constant 0 : i32
    %c0_i32_1 = arith.constant 0 : i32
    return %arg0, %c0_i32, %1, %c0_i32_0 : i32, i32, i32, i32
  }
  func.func @transform_2(%arg0: i32, %arg1: i32, %arg2: i32) -> (i32, i32, i32, i32) {
    %c0_i32 = arith.constant 0 : i32
    %c0_i32_0 = arith.constant 0 : i32
    %c0_i32_1 = arith.constant 0 : i32
    return %arg0, %arg1, %c0_i32, %c0_i32_0 : i32, i32, i32, i32
  }
}

</mosaic_0001>

<llo_original>
// kernel: tpu_custom_call.1
$region0: #{tpu_custom_call.1}
  #allocation0 [shape = 'u32[]', space=smem, size = 0x4, offset = 0x4, fixed_abs, tag = 'smem constant byte address 0x4 - core index']
  #allocation1 [shape = 'u32[144,128]{1,0:T(1,128)}', space=vmem, size = 0x12000, scoped, tag = 'internal scratch']
  #allocation2 [shape = 'f32[2,128]{1,0:T(2,128)}', space=vmem, size = 0x400, scoped, tag = 'scratch operand']
  %s0 = inlined_call_operand.hbm [shape: f32[2,4,2,128], index: 0, kind: input, shape index: {}]
  %s1 = inlined_call_operand.hbm [shape: f32[2,4,2,128], index: 1, kind: input, shape index: {}]
  %s2 = inlined_call_operand.hbm [shape: f32[2,1,8,128], index: 2, kind: output, shape index: {}]
  %s3 = sld [smem:[#allocation0]]
  $region57: #{tpu_custom_call.1} parent=0
    _
  %s5 = ssub.s32 1, %s3
  %s6 = scalar_select 0, %s5, %s3
  $region1: #{tpu_custom_call.1} parent=0
    #allocation3 [shape = 'u8[8192]{0}', space=vmem, size = 0x2000, scoped, tag = 'input window, operand 0']
    #allocation4 [shape = 's32[2]{0}', space=sflag, size = 0x8, scoped, tag = 'scoped memory for tpu_custom_call.1']
    #allocation5 [shape = 's32[2]{0}', space=sflag, size = 0x8, scoped, tag = 'scoped memory for tpu_custom_call.1']
    #allocation6 [shape = 'u8[8192]{0}', space=vmem, size = 0x2000, scoped, tag = 'input window, operand 1']
    #allocation7 [shape = 's32[2]{0}', space=sflag, size = 0x8, scoped, tag = 'scoped memory for tpu_custom_call.1']
    #allocation8 [shape = 'u8[8192]{0}', space=vmem, size = 0x2000, scoped, tag = 'output window, operand 0']
    %7 = vsyncpa [#allocation4], 0
    %s8 = scalar_lea.sflag [#allocation4], 1
    %9 = vsyncpa %s8, 0
    %10 = vsyncpa [#allocation7], 0
    %s11 = scalar_lea.sflag [#allocation7], 1
    %12 = vsyncpa %s11, 0
    %13 = vsyncpa [#allocation5], 0
    %s14 = scalar_lea.sflag [#allocation5], 1
    %15 = vsyncpa %s14, 0
    loop: start=0, step=1, limit=4
    $region2: #{tpu_custom_call.1} parent=1 // loop_pre_header
      _
    $region3: #{tpu_custom_call.1} parent=1 // loop_header
      %s17 = sphi 0, %s21
      %p18 = scmp.ge.s32.totalorder %s17, 4
      %s24 = sphi 0, %s43
      %s25 = sphi 0, %s39
      %s26 = sphi 0, %s35
      %s27 = sphi 0, %s24
      %s28 = sphi 0, %s25
      %s29 = sphi 0, %s26
      %s30 = sphi 0, %s27
      %s31 = sphi 0, %s28
      %s32 = sphi 0, %s29
      %s50 = sphi 0, %s52
      %s53 = sphi 0, %s50
      %s54 = sphi 0, %s53
      %s70 = sphi 0, %s54
      %s80 = sphi 0, %s82
      %s83 = sphi 0, %s80
      %s84 = sphi 0, %s83
      %s100 = sphi 0, %s84
      %s108 = sphi 0, %s110
      %s111 = sphi 0, %s108
      %s112 = sphi 0, %s111
      %s128 = sphi 0, %s112
    $region4: #{tpu_custom_call.1} parent=1 // loop_header_branch
      %20 = sbr.rel (%p18) target = $region8
    $region5: #{tpu_custom_call.1} parent=1 // loop_body
      %s22 = ssub.s32 %s17, 1
      %s23 = ssub.s32 %s17, 2
      %s33 = sadd.s32 1, %s26
      %p34 = scmp.ge.s32.totalorder %s33, 1
      %s35 = scalar_select %p34, 0, %s33
      %s36 = sadd.s32 1, %s25
      %s37 = scalar_select %p34, %s36, %s25
      %p38 = scmp.ge.s32.totalorder %s37, 1
      %s39 = scalar_select %p38, 0, %s37
      %s40 = sadd.s32 1, %s24
      %s41 = scalar_select %p38, %s40, %s24
      %p42 = scmp.ge.s32.totalorder %s41, 2
      %s43 = scalar_select %p42, 0, %s41
      %s44 = sadd.s32 %s25, %s26
      %s45 = sadd.s32 %s39, %s35
      %s46 = ssub.s32 %s24, %s43
      %s47 = ssub.s32 %s44, %s45
      %s48 = sor.u32 %s46, %s47
      %p49 = scmp.eq.s32.totalorder %s48, 0
      %s51 = sadd.s32 %s50, 1
      %s52 = scalar_select %p49, %s50, %s51
      %p55 = pneg %p49
      %p56 = scmp.eq.s32.totalorder %s17, 1
      %p57 = por %p55, %p56
      %p58 = scmp.ne.s32.totalorder %s50, %s53
      %p59 = scmp.eq.s32.totalorder %s17, 0
      %p60 = por %p58, %p59
      %p61 = scmp.ne.s32.totalorder %s50, %s53
      %p62 = scmp.eq.s32.totalorder %s22, 1
      %p63 = por %p61, %p62
      %p64 = scmp.ne.s32.totalorder %s53, %s54
      %p65 = scmp.eq.s32.totalorder %s22, 0
      %p66 = por %p64, %p65
      %p67 = scmp.ne.s32.totalorder %s53, %s54
      %p68 = scmp.eq.s32.totalorder %s23, 1
      %p69 = por %p67, %p68
      %p71 = scmp.ne.s32.totalorder %s54, %s70
      %p72 = scmp.eq.s32.totalorder %s23, 0
      %p73 = por %p71, %p72
      %s74 = sadd.s32 %s25, %s26
      %s75 = sadd.s32 %s39, %s35
      %s76 = ssub.s32 %s24, %s43
      %s77 = ssub.s32 %s74, %s75
      %s78 = sor.u32 %s76, %s77
      %p79 = scmp.eq.s32.totalorder %s78, 0
      %s81 = sadd.s32 %s80, 1
      %s82 = scalar_select %p79, %s80, %s81
      %p85 = pneg %p79
      %p86 = scmp.eq.s32.totalorder %s17, 1
      %p87 = por %p85, %p86
      %p88 = scmp.ne.s32.totalorder %s80, %s83
      %p89 = scmp.eq.s32.totalorder %s17, 0
      %p90 = por %p88, %p89
      %p91 = scmp.ne.s32.totalorder %s80, %s83
      %p92 = scmp.eq.s32.totalorder %s22, 1
      %p93 = por %p91, %p92
      %p94 = scmp.ne.s32.totalorder %s83, %s84
      %p95 = scmp.eq.s32.totalorder %s22, 0
      %p96 = por %p94, %p95
      %p97 = scmp.ne.s32.totalorder %s83, %s84
      %p98 = scmp.eq.s32.totalorder %s23, 1
      %p99 = por %p97, %p98
      %p101 = scmp.ne.s32.totalorder %s84, %s100
      %p102 = scmp.eq.s32.totalorder %s23, 0
      %p103 = por %p101, %p102
      %s104 = ssub.s32 %s24, %s43
      %s105 = ssub.s32 %s25, %s39
      %s106 = sor.u32 %s104, %s105
      %p107 = scmp.eq.s32.totalorder %s106, 0
      %s109 = sadd.s32 %s108, 1
      %s110 = scalar_select %p107, %s108, %s109
      %p113 = pneg %p107
      %p114 = scmp.eq.s32.totalorder %s17, 1
      %p115 = por %p113, %p114
      %p116 = scmp.ne.s32.totalorder %s108, %s111
      %p117 = scmp.eq.s32.totalorder %s17, 0
      %p118 = por %p116, %p117
      %p119 = scmp.ne.s32.totalorder %s108, %s111
      %p120 = scmp.eq.s32.totalorder %s22, 1
      %p121 = por %p119, %p120
      %p122 = scmp.ne.s32.totalorder %s111, %s112
      %p123 = scmp.eq.s32.totalorder %s22, 0
      %p124 = por %p122, %p123
      %p125 = scmp.ne.s32.totalorder %s111, %s112
      %p126 = scmp.eq.s32.totalorder %s23, 1
      %p127 = por %p125, %p126
      %p129 = scmp.ne.s32.totalorder %s112, %s128
      %p130 = scmp.eq.s32.totalorder %s23, 0
      %p131 = por %p129, %p130
      %p132 = scmp.le.s32.totalorder 1, %s17
      %p133 = scmp.lt.s32.totalorder %s17, 3
      %p134 = pnand %p132, %p133
      %p135 = pneg %p134
      // Predicated region
      $region9: #{tpu_custom_call.1} parent=5 // pred_check
        _
      $region10: #{tpu_custom_call.1} parent=5 // pred_check_branch
        %137 = sbr.rel (%p134) target = $region12
      $region11: #{tpu_custom_call.1} parent=5 // pred_region
        %s138 = ssub.s32 %s17, 1
      $region12: #{tpu_custom_call.1} parent=5 // pred_fallthru
        _
      %p139 = scmp.lt.s32.totalorder %s17, 2
      // Predicated region
      $region13: #{tpu_custom_call.1} parent=5 // pred_check
        %p140 = pneg %p139
      $region14: #{tpu_custom_call.1} parent=5 // pred_check_branch
        %142 = sbr.rel (%p140) target = $region16
      $region15: #{tpu_custom_call.1} parent=5 // pred_region
        // Predicated region
        $region17: #{tpu_custom_call.1} parent=15 // pred_check
          %p143 = pneg %p60
        $region18: #{tpu_custom_call.1} parent=15 // pred_check_branch
          %145 = sbr.rel (%p143) target = $region20
        $region19: #{tpu_custom_call.1} parent=15 // pred_region
          %s146 = sand.u32 %s50, 1
          %s147 = scalar_lea.sflag [#allocation4], %s146
          %s148 = sand.u32 %s50, 1
          %s149 = smul.addr %s148, 8
          %s150 = scalar_lea.vmem [#allocation3], %s149
          %s151 = sadd.s32 %s25, %s26
          %s153 = ssub.s32 128, 128
          %154 = vsyncadd %s147, %s153
          %s155 = smul.addr %s24, 4
          %s156 = sadd.s32 %s151, %s155
          %s157 = smul.addr %s156, 32
          %s158 = scalar_lea.hbm %s0, %s157
          %s159 = sshll.u32 %s150, 4
          %s160 = int_to_ptr.vmem [resolvable:$true] %s159
          %165 = dma.hbm_to_vmem [thread:$0]  %s158, 128, %s160, %s147, 32, 32, 2
        $region20: #{tpu_custom_call.1} parent=15 // pred_fallthru
          _
        // Predicated region
        $region21: #{tpu_custom_call.1} parent=15 // pred_check
          %p166 = pneg %p90
        $region22: #{tpu_custom_call.1} parent=15 // pred_check_branch
          %168 = sbr.rel (%p166) target = $region24
        $region23: #{tpu_custom_call.1} parent=15 // pred_region
          %s169 = sand.u32 %s80, 1
          %s170 = scalar_lea.sflag [#allocation7], %s169
          %s171 = sand.u32 %s80, 1
          %s172 = smul.addr %s171, 8
          %s173 = scalar_lea.vmem [#allocation6], %s172
          %s174 = sadd.s32 %s25, %s26
          %s176 = ssub.s32 128, 128
          %177 = vsyncadd %s170, %s176
          %s178 = smul.addr %s24, 4
          %s179 = sadd.s32 %s174, %s178
          %s180 = smul.addr %s179, 32
          %s181 = scalar_lea.hbm %s1, %s180
          %s182 = sshll.u32 %s173, 4
          %s183 = int_to_ptr.vmem [resolvable:$true] %s182
          %188 = dma.hbm_to_vmem [thread:$0]  %s181, 128, %s183, %s170, 32, 32, 2
        $region24: #{tpu_custom_call.1} parent=15 // pred_fallthru
          _
      $region16: #{tpu_custom_call.1} parent=5 // pred_fallthru
        _
      %p189 = scmp.le.s32.totalorder 1, %s17
      %p190 = scmp.lt.s32.totalorder %s17, 3
      %p191 = pnand %p189, %p190
      %p192 = pneg %p191
      // Predicated region
      $region25: #{tpu_custom_call.1} parent=5 // pred_check
        _
      $region26: #{tpu_custom_call.1} parent=5 // pred_check_branch
        %194 = sbr.rel (%p191) target = $region28
      $region27: #{tpu_custom_call.1} parent=5 // pred_region
        %s195 = ssub.s32 %s17, 1
        %s196 = sand.u32 %s53, 1
        %s197 = scalar_lea.sflag [#allocation4], %s196
        %s198 = sand.u32 %s53, 1
        %s199 = smul.addr %s198, 8
        %s200 = scalar_lea.vmem [#allocation3], %s199
        // Predicated region
        $region29: #{tpu_custom_call.1} parent=27 // pred_check
          %p201 = pneg %p66
        $region30: #{tpu_custom_call.1} parent=27 // pred_check_branch
          %203 = sbr.rel (%p201) target = $region32
        $region31: #{tpu_custom_call.1} parent=27 // pred_region
          %204 = dma.done %s197, 128
        $region32: #{tpu_custom_call.1} parent=27 // pred_fallthru
          _
        %s205 = sand.u32 %s83, 1
        %s206 = scalar_lea.sflag [#allocation7], %s205
        %s207 = sand.u32 %s83, 1
        %s208 = smul.addr %s207, 8
        %s209 = scalar_lea.vmem [#allocation6], %s208
        // Predicated region
        $region33: #{tpu_custom_call.1} parent=27 // pred_check
          %p210 = pneg %p96
        $region34: #{tpu_custom_call.1} parent=27 // pred_check_branch
          %212 = sbr.rel (%p210) target = $region36
        $region35: #{tpu_custom_call.1} parent=27 // pred_region
          %213 = dma.done %s206, 128
        $region36: #{tpu_custom_call.1} parent=27 // pred_fallthru
          _
        %s214 = sand.u32 %s53, 1
        %s215 = scalar_lea.sflag [#allocation4], %s214
        %s216 = sand.u32 %s53, 1
        %s217 = smul.addr %s216, 8
        %s218 = scalar_lea.vmem [#allocation3], %s217
        %p219 = pneg %p66
        %p220 = pneg %p63
        %s221 = sand.u32 %s83, 1
        %s222 = scalar_lea.sflag [#allocation7], %s221
        %s223 = sand.u32 %s83, 1
        %s224 = smul.addr %s223, 8
        %s225 = scalar_lea.vmem [#allocation6], %s224
        %p226 = pneg %p96
        %p227 = pneg %p93
        %p228 = pneg %p124
        %p229 = pneg %p121
        %s230 = sand.u32 %s111, 1
        %s231 = scalar_lea.sflag [#allocation5], %s230
        %s232 = sand.u32 %s111, 1
        %s233 = smul.addr %s232, 8
        %s234 = scalar_lea.vmem [#allocation8], %s233
        %s235 = sadd.s32 %s28, %s29
        %s236 = sadd.s32 %s28, %s29
        %p237 = scmp.eq.s32.totalorder %s29, 0
        // Predicated region
        $region37: #{tpu_custom_call.1} parent=27 // pred_check
          %p238 = pneg %p237
        $region38: #{tpu_custom_call.1} parent=27 // pred_check_branch
          %240 = sbr.rel (%p238) target = $region40
        $region39: #{tpu_custom_call.1} parent=27 // pred_region
          %241 = vst [vmem:[#allocation2] sm:$0x3] 0.0
        $region40: #{tpu_custom_call.1} parent=27 // pred_fallthru
          _
        %v242 = vld [vmem:[%s200] sm:$0x3]
        %s243 = scalar_lea.vmem %s200, 2 [#allocation3]
        %v244 = vld [vmem:[%s243] sm:$0x3]
        %s245 = scalar_lea.vmem %s200, 4 [#allocation3]
        %v246 = vld [vmem:[%s245] sm:$0x3]
        %s247 = scalar_lea.vmem %s200, 6 [#allocation3]
        %v248 = vld [vmem:[%s247] sm:$0x3]
        %v249 = vld [vmem:[%s209] sm:$0x3]
        %s250 = scalar_lea.vmem %s209, 2 [#allocation6]
        %v251 = vld [vmem:[%s250] sm:$0x3]
        %s252 = scalar_lea.vmem %s209, 4 [#allocation6]
        %v253 = vld [vmem:[%s252] sm:$0x3]
        %s254 = scalar_lea.vmem %s209, 6 [#allocation6]
        %v255 = vld [vmem:[%s254] sm:$0x3]
        %v256 = vadd.f32 %v242, %v244
        %v257 = vadd.f32 %v256, %v246
        %v258 = vadd.f32 %v257, %v248
        %v259 = vlog2.pop %v258
        %v260 = vmul.f32 %v259, 0.6931472
        %v261 = vlog2.pop %v242
        %v262 = vmul.f32 %v261, 0.6931472
        %v263 = vsub.f32 %v260, %v262
        %v264 = vmul.f32 %v249, %v263
        %v265 = vlog2.pop %v244
        %v266 = vmul.f32 %v265, 0.6931472
        %v267 = vsub.f32 %v260, %v266
        %v268 = vmul.f32 %v251, %v267
        %v269 = vadd.f32 %v264, %v268
        %v270 = vlog2.pop %v246
        %v271 = vmul.f32 %v270, 0.6931472
        %v272 = vsub.f32 %v260, %v271
        %v273 = vmul.f32 %v253, %v272
        %v274 = vadd.f32 %v269, %v273
        %v275 = vlog2.pop %v248
        %v276 = vmul.f32 %v275, 0.6931472
        %v277 = vsub.f32 %v260, %v276
        %v278 = vmul.f32 %v255, %v277
        %v279 = vadd.f32 %v274, %v278
        %v280 = vld [vmem:[#allocation2] sm:$0x3]
        %v281 = vadd.f32 %v280, %v279
        %282 = vst [vmem:[#allocation2] sm:$0x3] %v281
        // Predicated region
        $region41: #{tpu_custom_call.1} parent=27 // pred_check
          %p283 = pneg %p237
        $region42: #{tpu_custom_call.1} parent=27 // pred_check_branch
          %285 = sbr.rel (%p283) target = $region44
        $region43: #{tpu_custom_call.1} parent=27 // pred_region
          %v286 = vld [vmem:[#allocation2] sm:$0x3]
          %vm287 = vcmask 1041408
          %v288 = vsel %vm287, %v286, 0.0
          %289 = vadd.xlane.f32.xlu0 %v288
          %v290 = vpop.xlane.xlu0 %289
          %v291 = vrot.slane %v290, 4
          %v292 = vadd.f32 %v290, %v291
          %v293 = vrot.slane %v292, 2
          %v294 = vadd.f32 %v292, %v293
          %v295 = vrot.slane %v294, 1
          %v296 = vadd.f32 %v294, %v295
          %s297 = vtos %v296
          %v298 = vstv %s297
          %v299 = vadd.f32 %v298, 0.0
          %300 = vst [vmem:[%s234] sm:$0xff] %v299
        $region44: #{tpu_custom_call.1} parent=27 // pred_fallthru
          _
        %s301 = sand.u32 %s111, 1
        %s302 = scalar_lea.sflag [#allocation5], %s301
        %s303 = sand.u32 %s111, 1
        %s304 = smul.addr %s303, 8
        %s305 = scalar_lea.vmem [#allocation8], %s304
        // Predicated region
        $region45: #{tpu_custom_call.1} parent=27 // pred_check
          %p306 = pneg %p121
        $region46: #{tpu_custom_call.1} parent=27 // pred_check_branch
          %308 = sbr.rel (%p306) target = $region48
        $region47: #{tpu_custom_call.1} parent=27 // pred_region
          %s310 = ssub.s32 128, 128
          %311 = vsyncadd %s302, %s310
          %s312 = sadd.s32 %s28, %s27
          %s313 = smul.addr %s312, 128
          %s314 = scalar_lea.hbm %s2, %s313
          %s316 = sshll.u32 %s305, 4
          %s317 = int_to_ptr.vmem [resolvable:$true] %s316
          %319 = dma.vmem_to_hbm [thread:$0]  %s317, 128, %s314, %s302
        $region48: #{tpu_custom_call.1} parent=27 // pred_fallthru
          _
      $region28: #{tpu_custom_call.1} parent=5 // pred_fallthru
        _
      %p320 = scmp.le.s32.totalorder 2, %s17
      // Predicated region
      $region49: #{tpu_custom_call.1} parent=5 // pred_check
        %p321 = pneg %p320
      $region50: #{tpu_custom_call.1} parent=5 // pred_check_branch
        %323 = sbr.rel (%p321) target = $region52
      $region51: #{tpu_custom_call.1} parent=5 // pred_region
        %s324 = ssub.s32 %s17, 2
        // Predicated region
        $region53: #{tpu_custom_call.1} parent=51 // pred_check
          %p325 = pneg %p127
        $region54: #{tpu_custom_call.1} parent=51 // pred_check_branch
          %327 = sbr.rel (%p325) target = $region56
        $region55: #{tpu_custom_call.1} parent=51 // pred_region
          %s328 = sand.u32 %s112, 1
          %s329 = scalar_lea.sflag [#allocation5], %s328
          %s330 = sand.u32 %s112, 1
          %s331 = smul.addr %s330, 8
          %s332 = scalar_lea.vmem [#allocation8], %s331
          %333 = dma.done %s329, 128
        $region56: #{tpu_custom_call.1} parent=51 // pred_fallthru
          _
      $region52: #{tpu_custom_call.1} parent=5 // pred_fallthru
        _
    $region6: #{tpu_custom_call.1} parent=1 // loop_footer
      %s21 = sadd.s32 1, %s17
    $region7: #{tpu_custom_call.1} parent=1 // loop_footer_branch
      %16 = sbr.rel target = $region3
    $region8: #{tpu_custom_call.1} parent=1 // loop_exit
      _
    %334 = vsyncpa [#allocation4], 1
    %s335 = scalar_lea.sflag [#allocation4], 1
    %336 = vsyncpa %s335, 1
    %337 = vsyncpa [#allocation7], 1
    %s338 = scalar_lea.sflag [#allocation7], 1
    %339 = vsyncpa %s338, 1
    %340 = vsyncpa [#allocation5], 1
    %s341 = scalar_lea.sflag [#allocation5], 1
    %342 = vsyncpa %s341, 1

</llo_original>
